<compile_context>
chip_gen: v7x
topology: tpu7x:2x2x1
jax: 0.10.0
libtpu: 0.0.40
codegen_flags: <defaults>
</compile_context>

<pallas_src>
import math

import jax
import jax.numpy as jnp
from jax import lax
from jax.experimental import pallas as pl
from jax.experimental.pallas import tpu as pltpu


def _round_up(x, m):
    return (x + m - 1) // m * m


def _pick_tile(size, max_tile, align):
    """Largest t <= max_tile with t % align == 0 and size % t == 0.
    Returns `size` itself when size <= max_tile (a full-extent block is always
    legal regardless of alignment).  Returns None if no such tile exists."""
    if size <= max_tile:
        return size
    t = (max_tile // align) * align
    while t >= align:
        if size % t == 0:
            return t
        t -= align
    return None


def _vmem_limit(num_f32_elems_per_step, headroom=4 << 20):
    # double-buffered blocks + headroom, clamped into [32 MiB, 64 MiB] so the
    # same setting is valid on v5e/v6e (128 MiB VMEM) and v7x (64 MiB).
    need = 2 * 4 * num_f32_elems_per_step + headroom
    return int(min(max(need, 32 << 20), 64 << 20))


# ----------------------------------------------------------------------------
# Linear projection kernel: y = x @ wT + b, tiled over (M, N, K)
# ----------------------------------------------------------------------------

def _linear_kernel(x_ref, w_ref, b_ref, o_ref, acc_ref):
    @pl.when(pl.program_id(2) == 0)
    def _():
        acc_ref[...] = jnp.zeros_like(acc_ref)

    # bf16 MXU operands, f32 accumulation.
    acc_ref[...] += jnp.dot(x_ref[...].astype(jnp.bfloat16),
                            w_ref[...].astype(jnp.bfloat16),
                            preferred_element_type=jnp.float32)

    @pl.when(pl.program_id(2) == pl.num_programs(2) - 1)
    def _():
        o_ref[...] = (acc_ref[...] + b_ref[...]).astype(o_ref.dtype)


def pallas_linear(x, w, b, *, bm_max=512, bn_max=512, bk_max=1024):
    """y = x @ w.T + b ; x: (M, d_in), w: (d_out, d_in) [PyTorch layout], b: (d_out,)."""
    M, K = x.shape
    N = w.shape[0]
    wt = w.T  # one-time HBM-side transpose -> plain (M,K)x(K,N) MXU-direct dot

    bm = _pick_tile(M, bm_max, 8)
    Mp = M
    if bm is None:
        bm = min(bm_max, _round_up(M, 8))
        Mp = _round_up(M, bm)
        x = jnp.pad(x, ((0, Mp - M), (0, 0)))
    bn = _pick_tile(N, bn_max, 128) or N   # fallback: whole N per block
    bk = _pick_tile(K, bk_max, 128) or K   # fallback: whole K per block

    grid = (Mp // bm, N // bn, K // bk)
    block_elems = bm * bk + bk * bn + bn + 2 * bm * bn  # x, w, b, out, acc

    out = pl.pallas_call(
        _linear_kernel,
        out_shape=jax.ShapeDtypeStruct((Mp, N), jnp.float32),
        grid=grid,
        in_specs=[
            pl.BlockSpec((bm, bk), lambda i, j, k: (i, k)),
            pl.BlockSpec((bk, bn), lambda i, j, k: (k, j)),
            pl.BlockSpec((1, bn), lambda i, j, k: (0, j)),
        ],
        out_specs=pl.BlockSpec((bm, bn), lambda i, j, k: (i, j)),
        scratch_shapes=[pltpu.VMEM((bm, bn), jnp.float32)],
        compiler_params=pltpu.CompilerParams(
            dimension_semantics=("parallel", "parallel", "arbitrary"),
            vmem_limit_bytes=_vmem_limit(block_elems),
        ),
        cost_estimate=pl.CostEstimate(
            flops=2 * Mp * K * N,
            transcendentals=0,
            bytes_accessed=4 * (Mp * K + K * N + Mp * N + N),
        ),
    )(x, wt, b.reshape(1, N))

    return out[:M] if Mp != M else out


# ----------------------------------------------------------------------------
# Attention kernel: one (batch, head) and one q-tile per grid step.
# Inputs are head-major (b*h, n, d); softmax over the full nk per step.
# ----------------------------------------------------------------------------

def _attention_kernel(q_ref, k_ref, v_ref, out_ref, att_ref):
    # q: (1, tq, d_k)  (already scaled by 1/sqrt(d_k) via the fc_q weights)
    # k: (1, nk, d_k), v: (1, nk, d_v)
    q = q_ref[0].astype(jnp.bfloat16)
    k = k_ref[0].astype(jnp.bfloat16)

    # scores: contract d_k of both operands (no transpose), bf16 MXU, f32 acc
    s = lax.dot_general(q, k, (((1,), (1,)), ((), ())),
                        preferred_element_type=jnp.float32)          # (tq, nk)

    m = jnp.max(s, axis=-1, keepdims=True)
    e = jnp.exp(s - m)
    denom = jnp.sum(e, axis=-1, keepdims=True)
    att = e / denom                     # exact divide: softmax rows sum to 1
    # TODO(synk): emit att in bf16 (or drop it) when the caller allows; the f32
    # att writeback is the dominant HBM traffic at long sequence.
    att_ref[0] = att.astype(att_ref.dtype)

    out = jnp.dot(att.astype(jnp.bfloat16), v_ref[0].astype(jnp.bfloat16),
                  preferred_element_type=jnp.float32)                 # (tq, d_v)
    out_ref[0] = out.astype(out_ref.dtype)


def pallas_attention(q, k, v, *, tq_max=256):
    """q: (BH, nq, d_k), k: (BH, nk, d_k), v: (BH, nk, d_v)
       -> out (BH, nq, d_v), att (BH, nq, nk).  Softmax over nk, no mask."""
    BH, nq, d_k = q.shape
    nk = k.shape[1]
    d_v = v.shape[2]

    tq = _pick_tile(nq, tq_max, 8)
    nq_p = nq
    if tq is None:
        tq = min(tq_max, _round_up(nq, 8))
        nq_p = _round_up(nq, tq)
        q = jnp.pad(q, ((0, 0), (0, nq_p - nq), (0, 0)))

    grid = (BH, nq_p // tq)
    block_elems = tq * d_k + nk * d_k + nk * d_v + tq * d_v + tq * nk

    # TODO(synk): for very long nk, add an inner flash-style online-softmax loop
    # over key tiles; the full normalized att output (required by this module's
    # forward) would then need a rescale on writeback.
    out, att = pl.pallas_call(
        _attention_kernel,
        out_shape=(
            jax.ShapeDtypeStruct((BH, nq_p, d_v), jnp.float32),
            jax.ShapeDtypeStruct((BH, nq_p, nk), jnp.float32),
        ),
        grid=grid,
        in_specs=[
            pl.BlockSpec((1, tq, d_k), lambda b, i: (b, i, 0)),
            pl.BlockSpec((1, nk, d_k), lambda b, i: (b, 0, 0)),
            pl.BlockSpec((1, nk, d_v), lambda b, i: (b, 0, 0)),
        ],
        out_specs=(
            pl.BlockSpec((1, tq, d_v), lambda b, i: (b, i, 0)),
            pl.BlockSpec((1, tq, nk), lambda b, i: (b, i, 0)),
        ),
        compiler_params=pltpu.CompilerParams(
            dimension_semantics=("parallel", "parallel"),
            vmem_limit_bytes=_vmem_limit(block_elems),
        ),
        cost_estimate=pl.CostEstimate(
            flops=2 * BH * nq_p * nk * (d_k + d_v),
            transcendentals=BH * nq_p * nk,
            bytes_accessed=4 * BH * (nq_p * d_k + nk * d_k + nk * d_v
                                     + nq_p * d_v + nq_p * nk),
        ),
    )(q, k, v)

    if nq_p != nq:
        out = out[:, :nq]
        att = att[:, :nq]
    return out, att


# ----------------------------------------------------------------------------
# Module: parameter init + forward
# ----------------------------------------------------------------------------

def xavier_uniform(key, out_f, in_f):
    bound = math.sqrt(6.0 / (in_f + out_f))
    return jax.random.uniform(key, (out_f, in_f), jnp.float32, -bound, bound)


def init_params(key, d_model, d_k, d_v, h):
    kq, kk, kv, ko = jax.random.split(key, 4)
    return {
        "wq": xavier_uniform(kq, h * d_k, d_model),
        "bq": jnp.zeros((h * d_k,), jnp.float32),
        "wk": xavier_uniform(kk, h * d_k, d_model),
        "bk": jnp.zeros((h * d_k,), jnp.float32),
        "wv": xavier_uniform(kv, h * d_v, d_model),
        "bv": jnp.zeros((h * d_v,), jnp.float32),
        "wo": xavier_uniform(ko, d_model, h * d_v),
        "bo": jnp.zeros((d_model,), jnp.float32),
    }


def scaled_dot_product_attention(params, queries, keys, values,
                                 *, d_model, d_k, d_v, h):
    """Mirrors ScaledDotProductAttention.forward with
    attention_mask=None, attention_weights=None, history_states=None.
    Returns (out (b_s, nq, d_model), att (b_s, h, nq, nk))."""
    # TODO(synk): attention_mask / attention_weights / history_states /
    # single_query branches omitted (forward defaults); a mask would be applied
    # to s before the row max inside _attention_kernel.
    b_s, nq, _ = queries.shape
    nk = keys.shape[1]
    scale = 1.0 / math.sqrt(d_k)

    # fold softmax scale into the q projection (zero in-kernel cost)
    q = pallas_linear(queries.reshape(b_s * nq, d_model),
                      params["wq"] * scale, params["bq"] * scale)
    k = pallas_linear(keys.reshape(b_s * nk, d_model), params["wk"], params["bk"])
    v = pallas_linear(values.reshape(b_s * nk, d_model), params["wv"], params["bv"])

    # head-major layout (b*h, n, d): per-head operands arrive lane-aligned via
    # DMA, no in-kernel lane slicing / relayouts.
    q = q.reshape(b_s, nq, h, d_k).transpose(0, 2, 1, 3).reshape(b_s * h, nq, d_k)
    k = k.reshape(b_s, nk, h, d_k).transpose(0, 2, 1, 3).reshape(b_s * h, nk, d_k)
    v = v.reshape(b_s, nk, h, d_v).transpose(0, 2, 1, 3).reshape(b_s * h, nk, d_v)

    out, att = pallas_attention(q, k, v)

    att = att.reshape(b_s, h, nq, nk)
    out = out.reshape(b_s, h, nq, d_v).transpose(0, 2, 1, 3).reshape(b_s * nq, h * d_v)
    out = pallas_linear(out, params["wo"], params["bo"]).reshape(b_s, nq, d_model)
    return out, att


# ----------------------------------------------------------------------------
# Pure-JAX (f32) reference for a sanity check
# ----------------------------------------------------------------------------

def reference(params, queries, keys, values, *, d_model, d_k, d_v, h):
    b_s, nq, _ = queries.shape
    nk = keys.shape[1]
    q = (queries @ params["wq"].T + params["bq"]).reshape(b_s, nq, h, d_k).transpose(0, 2, 1, 3)
    k = (keys @ params["wk"].T + params["bk"]).reshape(b_s, nk, h, d_k).transpose(0, 2, 1, 3)
    v = (values @ params["wv"].T + params["bv"]).reshape(b_s, nk, h, d_v).transpose(0, 2, 1, 3)
    att = jnp.einsum("bhqd,bhkd->bhqk", q, k) / math.sqrt(d_k)
    att = jax.nn.softmax(att, axis=-1)
    out = jnp.einsum("bhqk,bhkd->bhqd", att, v).transpose(0, 2, 1, 3).reshape(b_s, nq, h * d_v)
    out = out @ params["wo"].T + params["bo"]
    return out, att


if __name__ == "__main__":
    # Small shapes consistent with the module's forward
    b_s, nq, nk = 2, 8, 8
    d_model, d_k, d_v, h = 32, 8, 8, 4

    key = jax.random.PRNGKey(0)
    kp, kq_, kk_, kv_ = jax.random.split(key, 4)
    params = init_params(kp, d_model, d_k, d_v, h)

    queries = jax.random.normal(kq_, (b_s, nq, d_model), jnp.float32)
    keys = jax.random.normal(kk_, (b_s, nk, d_model), jnp.float32)
    values = jax.random.normal(kv_, (b_s, nk, d_model), jnp.float32)

    out, att = scaled_dot_product_attention(
        params, queries, keys, values, d_model=d_model, d_k=d_k, d_v=d_v, h=h)
    jax.block_until_ready((out, att))

    assert out.shape == (b_s, nq, d_model)
    assert att.shape == (b_s, h, nq, nk)

    out_ref, att_ref = reference(
        params, queries, keys, values, d_model=d_model, d_k=d_k, d_v=d_v, h=h)
    # tolerance relaxed vs the pure-f32 reference because MXU operands are bf16
    # (accumulation stays f32); softmax divide itself is exact.
    assert jnp.allclose(att, att_ref, atol=2e-2, rtol=2e-2)
    assert jnp.allclose(out, out_ref, atol=2e-2, rtol=2e-2)

    print("KERNEL_OK")
</pallas_src>

<mosaic_0001>
module attributes {stable_mosaic.version = 11 : i64} {
  func.func @_linear_kernel(%arg0: i32, %arg1: i32, %arg2: i32, %arg3: memref<16x32xf32, #tpu.memory_space<vmem>>, %arg4: memref<32x32xf32, #tpu.memory_space<vmem>>, %arg5: memref<1x32xf32, #tpu.memory_space<vmem>>, %arg6: memref<16x32xf32, #tpu.memory_space<vmem>>, %arg7: memref<16x32xf32, #tpu.memory_space<vmem>>) attributes {dimension_semantics = [#tpu.dimension_semantics<parallel>, #tpu.dimension_semantics<parallel>, #tpu.dimension_semantics<arbitrary>], iteration_bounds = array<i64: 1, 1, 1>, scalar_prefetch = 0 : i64, scratch_operands = 1 : i64, tpu.core_type = #tpu.core_type<tc>, window_params = [{transform_indices = @transform_0, window_bounds = array<i64: 16, 32>}, {transform_indices = @transform_1, window_bounds = array<i64: 32, 32>}, {transform_indices = @transform_2, window_bounds = array<i64: 1, 32>}, {transform_indices = @transform_3, window_bounds = array<i64: 16, 32>}]} {
    %c0_i32 = arith.constant 0 : i32
    %0 = arith.cmpi eq, %arg2, %c0_i32 : i32
    %1 = arith.extui %0 : i1 to i32
    %c0_i32_0 = arith.constant 0 : i32
    %2 = arith.cmpi ne, %1, %c0_i32_0 : i32
    scf.if %2 {
      %cst_10 = arith.constant 0.000000e+00 : f32
      %14 = vector.broadcast %cst_10 : f32 to vector<16x32xf32>
      %c0_11 = arith.constant 0 : index
      %c0_12 = arith.constant 0 : index
      %15 = vector.load %arg7[%c0_11, %c0_12] : memref<16x32xf32, #tpu.memory_space<vmem>>, vector<16x32xf32>
      tpu.vector_store %arg7[%c0_11, %c0_12], %14 {strides = array<i32>} : memref<16x32xf32, #tpu.memory_space<vmem>>, vector<16x32xf32>,
    } else {
    }
    %c0 = arith.constant 0 : index
    %c0_1 = arith.constant 0 : index
    %3 = vector.load %arg7[%c0, %c0_1] : memref<16x32xf32, #tpu.memory_space<vmem>>, vector<16x32xf32>
    %c0_2 = arith.constant 0 : index
    %c0_3 = arith.constant 0 : index
    %4 = vector.load %arg3[%c0_2, %c0_3] : memref<16x32xf32, #tpu.memory_space<vmem>>, vector<16x32xf32>
    %5 = arith.truncf %4 : vector<16x32xf32> to vector<16x32xbf16>
    %c0_4 = arith.constant 0 : index
    %c0_5 = arith.constant 0 : index
    %6 = vector.load %arg4[%c0_4, %c0_5] : memref<32x32xf32, #tpu.memory_space<vmem>>, vector<32x32xf32>
    %7 = arith.truncf %6 : vector<32x32xf32> to vector<32x32xbf16>
    %cst = arith.constant dense<0.000000e+00> : vector<16x32xf32>
    %8 = tpu.matmul %5, %7, %cst {dimension_numbers = #tpu.dot_dimension_numbers<[1], [0], [0], [1], [0, 0, 1, 1], [], []>} : vector<16x32xbf16>, vector<32x32xbf16>, vector<16x32xf32> -> vector<16x32xf32>
    %9 = arith.addf %3, %8 : vector<16x32xf32>
    %c0_6 = arith.constant 0 : index
    %c0_7 = arith.constant 0 : index
    %10 = vector.load %arg7[%c0_6, %c0_7] : memref<16x32xf32, #tpu.memory_space<vmem>>, vector<16x32xf32>
    tpu.vector_store %arg7[%c0_6, %c0_7], %9 {strides = array<i32>} : memref<16x32xf32, #tpu.memory_space<vmem>>, vector<16x32xf32>,
    %c0_i32_8 = arith.constant 0 : i32
    %11 = arith.cmpi eq, %arg2, %c0_i32_8 : i32
    %12 = arith.extui %11 : i1 to i32
    %c0_i32_9 = arith.constant 0 : i32
    %13 = arith.cmpi ne, %12, %c0_i32_9 : i32
    scf.if %13 {
      %c0_10 = arith.constant 0 : index
      %c0_11 = arith.constant 0 : index
      %14 = vector.load %arg7[%c0_10, %c0_11] : memref<16x32xf32, #tpu.memory_space<vmem>>, vector<16x32xf32>
      %c0_12 = arith.constant 0 : index
      %c0_13 = arith.constant 0 : index
      %15 = vector.load %arg5[%c0_12, %c0_13] : memref<1x32xf32, #tpu.memory_space<vmem>>, vector<1x32xf32>
      %16 = vector.broadcast %15 : vector<1x32xf32> to vector<16x32xf32>
      %17 = arith.addf %14, %16 : vector<16x32xf32>
      %c0_14 = arith.constant 0 : index
      %c0_15 = arith.constant 0 : index
      %18 = vector.load %arg6[%c0_14, %c0_15] : memref<16x32xf32, #tpu.memory_space<vmem>>, vector<16x32xf32>
      tpu.vector_store %arg6[%c0_14, %c0_15], %17 {strides = array<i32>} : memref<16x32xf32, #tpu.memory_space<vmem>>, vector<16x32xf32>,
    } else {
    }
    return
  }
  func.func @transform_0(%arg0: i32, %arg1: i32, %arg2: i32) -> (i32, i32) {
    %c0_i32 = arith.constant 0 : i32
    return %arg0, %arg2 : i32, i32
  }
  func.func @transform_1(%arg0: i32, %arg1: i32, %arg2: i32) -> (i32, i32) {
    %c0_i32 = arith.constant 0 : i32
    return %arg2, %arg1 : i32, i32
  }
  func.func @transform_2(%arg0: i32, %arg1: i32, %arg2: i32) -> (i32, i32) {
    %c0_i32 = arith.constant 0 : i32
    %c0_i32_0 = arith.constant 0 : i32
    return %c0_i32, %arg1 : i32, i32
  }
  func.func @transform_3(%arg0: i32, %arg1: i32, %arg2: i32) -> (i32, i32) {
    %c0_i32 = arith.constant 0 : i32
    return %arg0, %arg1 : i32, i32
  }
}

</mosaic_0001>

<llo_original>
// kernel: tpu_custom_call.1
$region0: #{tpu_custom_call.1}
  #allocation0 [shape = 'u32[]', space=smem, size = 0x4, offset = 0x4, fixed_abs, tag = 'smem constant byte address 0x4 - core index']
  #allocation1 [shape = 'u32[144,128]{1,0:T(1,128)}', space=vmem, size = 0x12000, scoped, tag = 'internal scratch']
  #allocation2 [shape = 'f32[16,32]{1,0:T(8,128)}', space=vmem, size = 0x2000, scoped, tag = 'scratch operand']
  %s0 = inlined_call_operand.hbm [shape: f32[16,32], index: 0, kind: input, shape index: {}]
  %s1 = inlined_call_operand.hbm [shape: f32[32,32], index: 1, kind: input, shape index: {}]
  %s2 = inlined_call_operand.vmem [shape: f32[1,32], index: 2, kind: input, shape index: {}]
  %s3 = inlined_call_operand.hbm [shape: f32[16,32], index: 3, kind: output, shape index: {}]
  %s4 = sld [smem:[#allocation0]]
  $region38: #{tpu_custom_call.1} parent=0
    _
  %s6 = ssub.s32 1, %s4
  %s7 = scalar_select 0, %s6, %s4
  $region1: #{tpu_custom_call.1} parent=0
    #allocation3 [shape = 'u8[8192]{0}', space=vmem, size = 0x2000, scoped, tag = 'input window, operand 0, single buffered']
    #allocation4 [shape = 's32[1]{0}', space=sflag, size = 0x4, scoped, tag = 'scoped memory for tpu_custom_call.1']
    #allocation5 [shape = 's32[1]{0}', space=sflag, size = 0x4, scoped, tag = 'scoped memory for tpu_custom_call.1']
    #allocation6 [shape = 'u8[16384]{0}', space=vmem, size = 0x4000, scoped, tag = 'input window, operand 1, single buffered']
    #allocation7 [shape = 's32[1]{0}', space=sflag, size = 0x4, scoped, tag = 'scoped memory for tpu_custom_call.1']
    #allocation8 [shape = 'u8[8192]{0}', space=vmem, size = 0x2000, scoped, tag = 'output window, operand 0, single buffered']
    %8 = vsyncpa [#allocation4], 0
    %9 = vsyncpa [#allocation7], 0
    %10 = vsyncpa [#allocation5], 0
    // Predicated region
    $region2: #{tpu_custom_call.1} parent=1 // pred_check
      _
    $region3: #{tpu_custom_call.1} parent=1 // pred_check_branch
      %12 = sbr.rel (0) target = $region5
    $region4: #{tpu_custom_call.1} parent=1 // pred_region
      %s14 = ssub.s32 256, 256
      %15 = vsyncadd [#allocation4], %s14
      %s16 = sshll.u32 [#allocation3], 4
      %s17 = int_to_ptr.vmem [resolvable:$true] %s16
      %22 = dma.hbm_to_vmem [thread:$0]  %s0, 256, %s17, [#allocation4], 128, 128, 8
    $region5: #{tpu_custom_call.1} parent=1 // pred_fallthru
      _
    // Predicated region
    $region6: #{tpu_custom_call.1} parent=1 // pred_check
      _
    $region7: #{tpu_custom_call.1} parent=1 // pred_check_branch
      %24 = sbr.rel (0) target = $region9
    $region8: #{tpu_custom_call.1} parent=1 // pred_region
      %s26 = ssub.s32 512, 512
      %27 = vsyncadd [#allocation7], %s26
      %s28 = sshll.u32 [#allocation6], 4
      %s29 = int_to_ptr.vmem [resolvable:$true] %s28
      %34 = dma.hbm_to_vmem [thread:$0]  %s1, 512, %s29, [#allocation7], 128, 128, 8
    $region9: #{tpu_custom_call.1} parent=1 // pred_fallthru
      _
    // Predicated region
    $region10: #{tpu_custom_call.1} parent=1 // pred_check
      _
    $region11: #{tpu_custom_call.1} parent=1 // pred_check_branch
      %36 = sbr.rel (0) target = $region13
    $region12: #{tpu_custom_call.1} parent=1 // pred_region
      _
    $region13: #{tpu_custom_call.1} parent=1 // pred_fallthru
      _
    // Predicated region
    $region14: #{tpu_custom_call.1} parent=1 // pred_check
      _
    $region15: #{tpu_custom_call.1} parent=1 // pred_check_branch
      %38 = sbr.rel (0) target = $region17
    $region16: #{tpu_custom_call.1} parent=1 // pred_region
      %39 = dma.done [#allocation4], 256
    $region17: #{tpu_custom_call.1} parent=1 // pred_fallthru
      _
    // Predicated region
    $region18: #{tpu_custom_call.1} parent=1 // pred_check
      _
    $region19: #{tpu_custom_call.1} parent=1 // pred_check_branch
      %41 = sbr.rel (0) target = $region21
    $region20: #{tpu_custom_call.1} parent=1 // pred_region
      %42 = dma.done [#allocation7], 512
    $region21: #{tpu_custom_call.1} parent=1 // pred_fallthru
      _
    %p44 = scmp.eq.s32.totalorder 0, 0
    // Predicated region
    $region22: #{tpu_custom_call.1} parent=1 // pred_check
      %p45 = pneg %p44
    $region23: #{tpu_custom_call.1} parent=1 // pred_check_branch
      %47 = sbr.rel (%p45) target = $region25
    $region24: #{tpu_custom_call.1} parent=1 // pred_region
      %vm48 = vcmask 261120
      %49 = vst.msk [vmem:[#allocation2] sm:$0xff] %vm48, 0.0
      %50 = vst.msk [vmem:[#allocation2 + $0x8] sm:$0xff] %vm48, 0.0
    $region25: #{tpu_custom_call.1} parent=1 // pred_fallthru
      _
    %v51 = vld [vmem:[#allocation2] sm:$0xff]
    %v52 = vld [vmem:[#allocation2 + $0x8] sm:$0xff]
    %v53 = vld [vmem:[#allocation3] sm:$0xff]
    %v54 = vld [vmem:[#allocation3 + $0x8] sm:$0xff]
    %v55 = vpack.c.bf16 %v54, %v53
    %v56 = vld [vmem:[#allocation6] sm:$0xff]
    %v57 = vld [vmem:[#allocation6 + $0x8] sm:$0xff]
    %v58 = vld [vmem:[#allocation6 + $0x10] sm:$0xff]
    %v59 = vld [vmem:[#allocation6 + $0x18] sm:$0xff]
    %v60 = vpack.c.bf16 %v57, %v56
    %v61 = vpack.c.bf16 %v59, %v58
    %vm62 = vcmask 261120
    %v64 = vsel %vm62, %v55, 0
    %66 = vmatprep.subr.bf16.mxu0 0
    %67 = vmatpush1.bf16.msra.mxu0 %v60
    %68 = vmatprep.subr.bf16.mxu0 0
    %69 = vmatpush1.bf16.msra.mxu0 %v61
    %70 = vmatprep.subr.bf16.mxu0 0
    %71 = vmatpush1.bf16.msra.mxu0 0
    %72 = vmatprep.subr.bf16.mxu0 0
    %73 = vmatpush1.bf16.msra.mxu0 0
    %74 = vmatprep.subr.bf16.mxu0 0
    %75 = vmatpush1.bf16.msra.mxu0 0
    %76 = vmatprep.subr.bf16.mxu0 0
    %77 = vmatpush1.bf16.msra.mxu0 0
    %78 = vmatprep.subr.bf16.mxu0 0
    %79 = vmatpush1.bf16.msra.mxu0 0
    %80 = vmatprep.subr.bf16.mxu0 0
    %81 = vmatpush1.bf16.msra.mxu0 0
    %82 = vmatprep.subr.bf16.mxu0 0
    %83 = vmatpush1.bf16.msra.mxu0 0
    %84 = vmatprep.subr.bf16.mxu0 0
    %85 = vmatpush1.bf16.msra.mxu0 0
    %86 = vmatprep.subr.bf16.mxu0 0
    %87 = vmatpush1.bf16.msra.mxu0 0
    %88 = vmatprep.subr.bf16.mxu0 0
    %89 = vmatpush1.bf16.msra.mxu0 0
    %90 = vmatprep.subr.bf16.mxu0 0
    %91 = vmatpush1.bf16.msra.mxu0 0
    %92 = vmatprep.subr.bf16.mxu0 0
    %93 = vmatpush1.bf16.msra.mxu0 0
    %94 = vmatprep.subr.bf16.mxu0 0
    %95 = vmatpush1.bf16.msra.mxu0 0
    %96 = vmatprep.subr.bf16.mxu0 0
    %97 = vmatpush1.bf16.msra.mxu0 0
    %98 = vmatprep.mubr.bf16.mxu0 0
    %99 = vmatmul.mubr.bf16.gmra.mrb[0].mxu0 %v64
    %v100 = vpop.f32.mrb[0].mxu0
    %v101 = vadd.f32 0.0, %v100
    %v102 = vpop.f32.mrb[0].mxu0
    %v103 = vpop.f32.mrb[0].mxu0
    %v104 = vadd.f32 0.0, %v103
    %v105 = vpop.f32.mrb[0].mxu0
    %106 = vdwg.mxu0
    %v107 = vadd.f32 %v51, %v101
    %v108 = vadd.f32 %v52, %v104
    %109 = vst.msk [vmem:[#allocation2] sm:$0xff] %vm62, %v107
    %110 = vst.msk [vmem:[#allocation2 + $0x8] sm:$0xff] %vm62, %v108
    // Predicated region
    $region26: #{tpu_custom_call.1} parent=1 // pred_check
      %p111 = pneg %p44
    $region27: #{tpu_custom_call.1} parent=1 // pred_check_branch
      %113 = sbr.rel (%p111) target = $region29
    $region28: #{tpu_custom_call.1} parent=1 // pred_region
      %v114 = vld [vmem:[#allocation2] sm:$0xff]
      %v115 = vld [vmem:[#allocation2 + $0x8] sm:$0xff]
      %v116 = vld [vmem:[%s2] sm:$0x1]
      %v118 = vlaneseq
      %v119 = vshrl.u32 %v118, 7
      %v120 = vsub.s32 0, %v119
      %v121 = vrot.slane %v116, %v120
      %v123 = vadd.f32 %v114, %v121
      %v124 = vadd.f32 %v115, %v121
      %125 = vst.msk [vmem:[#allocation8] sm:$0xff] %vm62, %v123
      %126 = vst.msk [vmem:[#allocation8 + $0x8] sm:$0xff] %vm62, %v124
    $region29: #{tpu_custom_call.1} parent=1 // pred_fallthru
      _
    // Predicated region
    $region30: #{tpu_custom_call.1} parent=1 // pred_check
      _
    $region31: #{tpu_custom_call.1} parent=1 // pred_check_branch
      %128 = sbr.rel (0) target = $region33
    $region32: #{tpu_custom_call.1} parent=1 // pred_region
      %s130 = ssub.s32 256, 256
      %131 = vsyncadd [#allocation5], %s130
      %s132 = sshll.u32 [#allocation8], 4
      %s133 = int_to_ptr.vmem [resolvable:$true] %s132
      %138 = dma.vmem_to_hbm [thread:$0]  %s133, 256, %s3, [#allocation5], 128, 128, 8
    $region33: #{tpu_custom_call.1} parent=1 // pred_fallthru
      _
    // Predicated region
    $region34: #{tpu_custom_call.1} parent=1 // pred_check
      _
    $region35: #{tpu_custom_call.1} parent=1 // pred_check_branch
      %140 = sbr.rel (0) target = $region37
    $region36: #{tpu_custom_call.1} parent=1 // pred_region
      %141 = dma.done [#allocation5], 256
    $region37: #{tpu_custom_call.1} parent=1 // pred_fallthru
      _
    %142 = vsyncpa [#allocation4], 1
    %143 = vsyncpa [#allocation7], 1
    %144 = vsyncpa [#allocation5], 1

</llo_original>
